<compile_context>
chip_gen: v5e
topology: v5e:2x2
jax: 0.10.0
libtpu: 0.0.40
codegen_flags: <defaults>
</compile_context>

<pallas_src>
import functools

import jax
import jax.numpy as jnp
from jax import lax
from jax.experimental import pallas as pl
from jax.experimental.pallas import tpu as pltpu


def _round_up(x, m):
    return ((x + m - 1) // m) * m


# ----------------------------- Pallas kernel ------------------------------ #
def resnet_head_kernel(patch_ref, wconv_ref, shift_ref, wfc_ref, bfc_ref,
                       out_ref, acc_ref, *, inv_s, ts):
    s_idx = pl.program_id(1)

    @pl.when(s_idx == 0)
    def _():
        acc_ref[...] = jnp.zeros_like(acc_ref)

    # conv1 as a lane-dense MXU matmul:
    #   (ts, Kp) bf16 @ (Kp, Cout_p) bf16 -> (ts, Cout_p) f32
    conv = jnp.dot(patch_ref[0], wconv_ref[...],
                   preferred_element_type=jnp.float32)
    # fused BatchNorm shift (scale already folded into the weights) + ReLU
    y = jnp.maximum(conv + shift_ref[...], 0.0)

    # adaptive avg pool (1,1): per-step partial sums as pure VPU slab adds
    # into an (8, Cout_p) accumulator; the 8->1 sublane reduce is deferred to
    # the epilogue so no XLU reduce sits in the hot loop.
    if ts % 8 == 0:
        acc_ref[...] += jnp.sum(y.reshape(ts // 8, 8, -1), axis=0)
    else:
        # TODO(synk): odd tile sizes fall back to a per-step sublane reduce.
        acc_ref[0:1, :] += jnp.sum(y, axis=0, keepdims=True)

    @pl.when(s_idx == pl.num_programs(1) - 1)
    def _():
        pooled = jnp.sum(acc_ref[...], axis=0, keepdims=True) * inv_s  # (1, Cout_p)
        # fc: (1, Cout_p) @ (Cout_p, nc_p) + bias -> lane-dense (1, nc_p)
        logits = jnp.dot(pooled, wfc_ref[...],
                         preferred_element_type=jnp.float32) + bfc_ref[...]
        out_ref[0] = logits.astype(out_ref.dtype)


def resnet_head_pallas(patches, wconv, shift, wfc, bfc, *, ts):
    n, s, kp = patches.shape
    cout_p = wconv.shape[1]
    nc_p = wfc.shape[1]
    assert s % ts == 0

    # Explicit VMEM budget (double-buffered patch tile + resident weights),
    # clamped so a tile tuned on v5e/v6e (128 MiB) stays safe on v7x (64 MiB).
    tile_bytes = ts * kp * 2
    resident_bytes = (kp * cout_p * 2 + cout_p * nc_p * 4
                      + (cout_p + nc_p) * 4 + 8 * cout_p * 4)
    vmem_limit = int(min(48 << 20,
                         max(16 << 20,
                             3 * tile_bytes + 2 * resident_bytes + (2 << 20))))

    kernel = functools.partial(resnet_head_kernel, inv_s=1.0 / float(s), ts=ts)
    return pl.pallas_call(
        kernel,
        out_shape=jax.ShapeDtypeStruct((n, 1, nc_p), jnp.float32),
        grid_spec=pltpu.PrefetchScalarGridSpec(
            num_scalar_prefetch=0,
            grid=(n, s // ts),
            in_specs=[
                # big array: streamed / double-buffered per (image, spatial tile)
                pl.BlockSpec((1, ts, kp), lambda b, si: (b, si, 0)),
                # weights / biases: VMEM-resident across the whole grid
                pl.BlockSpec((kp, cout_p), lambda b, si: (0, 0)),
                pl.BlockSpec((1, cout_p), lambda b, si: (0, 0)),
                pl.BlockSpec((cout_p, nc_p), lambda b, si: (0, 0)),
                pl.BlockSpec((1, nc_p), lambda b, si: (0, 0)),
            ],
            out_specs=pl.BlockSpec((1, 1, nc_p), lambda b, si: (b, 0, 0)),
            scratch_shapes=[pltpu.VMEM((8, cout_p), jnp.float32)],
        ),
        compiler_params=pltpu.CompilerParams(
            dimension_semantics=("parallel", "arbitrary"),
            vmem_limit_bytes=vmem_limit),
    )(patches, wconv, shift, wfc, bfc)


# ------------------------------ JAX glue ---------------------------------- #
def im2col_7x7_s2_p3(x_nhwc, kp, dtype=jnp.bfloat16):
    """7x7/stride-2/pad-3 patches as (N, S, Kp); K ordered cin*49 + kh*7 + kw.

    Built directly in (N, S, K) order (taps stacked as the minor-most axis),
    in bf16, with a single pad for K -> Kp: no transposes or re-writes of the
    49x-inflated array.
    """
    n, h, w, cin = x_nhwc.shape
    ho = (h + 2 * 3 - 7) // 2 + 1
    wo = (w + 2 * 3 - 7) // 2 + 1
    xp = jnp.pad(x_nhwc.astype(dtype), ((0, 0), (3, 3), (3, 3), (0, 0)))
    pats = []
    for dh in range(7):
        for dw in range(7):
            pats.append(xp[:, dh:dh + 2 * ho - 1:2, dw:dw + 2 * wo - 1:2, :])
    p = jnp.stack(pats, axis=4)                    # (N, Ho, Wo, Cin, 49)
    p = p.reshape(n, ho * wo, cin * 49)            # (N, S, K) -- pure reshape
    k = cin * 49
    if kp > k:
        p = jnp.pad(p, ((0, 0), (0, 0), (0, kp - k)))
    return p, ho, wo


def _pick_spatial_tile(s, kp, max_tile_bytes=8 << 20):
    """Largest multiple-of-8 divisor of S whose bf16 tile fits the byte budget."""
    max_ts = max(8, max_tile_bytes // (kp * 2))
    best = None
    ts = 8
    while ts <= min(s, max_ts):
        if s % ts == 0:
            best = ts
        ts += 8
    return best if best is not None else s   # tiny images: one full-image tile


def resnet_forward(x_nchw, params, num_classes):
    eps = 1e-5
    n = x_nchw.shape[0]
    cout, cin = params["wconv"].shape[0], params["wconv"].shape[1]
    k = cin * 49
    kp = _round_up(k, 16)            # bf16 sublane tile for the weight's K axis
    cout_p = _round_up(cout, 128)    # fill the 128-wide MXU; do not pad further
    nc_p = _round_up(num_classes, 128)

    x_nhwc = jnp.transpose(x_nchw, (0, 2, 3, 1))
    patches, ho, wo = im2col_7x7_s2_p3(x_nhwc, kp)   # (N, S, Kp) bf16
    s = ho * wo
    ts = _pick_spatial_tile(s, kp)

    # BN (eval): fold scale into conv weights; keep shift as a per-channel bias.
    scale = params["gamma"] / jnp.sqrt(params["var"] + eps)
    shift = params["beta"] - params["mean"] * scale

    wconv = params["wconv"].reshape(cout, k) * scale[:, None]          # (Cout, K)
    wconv_p = jnp.zeros((kp, cout_p), jnp.float32).at[:k, :cout].set(wconv.T)
    shift_p = jnp.zeros((1, cout_p), jnp.float32).at[0, :cout].set(shift)
    wfc_p = jnp.zeros((cout_p, nc_p), jnp.float32).at[:cout, :num_classes].set(
        params["wfc"])
    bfc_p = jnp.zeros((1, nc_p), jnp.float32).at[0, :num_classes].set(
        params["bfc"])

    out = resnet_head_pallas(
        patches, wconv_p.astype(jnp.bfloat16), shift_p, wfc_p, bfc_p, ts=ts)
    return out.reshape(n, nc_p)[:, :num_classes]


def reference_forward(x_nchw, params):
    eps = 1e-5
    conv = lax.conv_general_dilated(
        x_nchw, params["wconv"], window_strides=(2, 2),
        padding=((3, 3), (3, 3)),
        dimension_numbers=("NCHW", "OIHW", "NCHW"))
    scale = params["gamma"] / jnp.sqrt(params["var"] + eps)
    shift = params["beta"] - params["mean"] * scale
    y = jnp.maximum(conv * scale.reshape(1, -1, 1, 1)
                    + shift.reshape(1, -1, 1, 1), 0.0)
    pooled = jnp.mean(y, axis=(2, 3))                 # (N, 64)
    return pooled @ params["wfc"] + params["bfc"]


# ------------------------------ main --------------------------------------- #
if __name__ == "__main__":
    key = jax.random.PRNGKey(0)
    ks = jax.random.split(key, 8)

    N, CIN, H, W = 2, 3, 16, 16
    COUT = 64
    NUM_CLASSES = 10   # constructor arg; small value for a small run

    x = jax.random.normal(ks[0], (N, CIN, H, W), dtype=jnp.float32)

    params = {
        "wconv": 0.1 * jax.random.normal(ks[1], (COUT, CIN, 7, 7), jnp.float32),
        "gamma": 1.0 + 0.1 * jax.random.normal(ks[2], (COUT,), jnp.float32),
        "beta":  0.1 * jax.random.normal(ks[3], (COUT,), jnp.float32),
        "mean":  0.1 * jax.random.normal(ks[4], (COUT,), jnp.float32),
        "var":   jax.random.uniform(ks[5], (COUT,), jnp.float32, 0.5, 1.5),
        "wfc":   0.1 * jax.random.normal(ks[6], (COUT, NUM_CLASSES), jnp.float32),
        "bfc":   0.1 * jax.random.normal(ks[7], (NUM_CLASSES,), jnp.float32),
    }

    out = jax.block_until_ready(resnet_forward(x, params, NUM_CLASSES))
    ref = reference_forward(x, params)

    assert out.shape == (N, NUM_CLASSES)
    # bf16 MXU operands -> relaxed tolerance vs the f32 reference
    assert jnp.allclose(out, ref, atol=2e-2, rtol=2e-2), "mismatch vs JAX reference"

    print("KERNEL_OK")
</pallas_src>

<mosaic_0001>
module attributes {stable_mosaic.version = 11 : i64} {
  func.func @resnet_head_kernel(%arg0: i32, %arg1: i32, %arg2: memref<1x64x160xbf16, #tpu.memory_space<vmem>>, %arg3: memref<160x128xbf16, #tpu.memory_space<vmem>>, %arg4: memref<1x128xf32, #tpu.memory_space<vmem>>, %arg5: memref<128x128xf32, #tpu.memory_space<vmem>>, %arg6: memref<1x128xf32, #tpu.memory_space<vmem>>, %arg7: memref<1x1x128xf32, #tpu.memory_space<vmem>>, %arg8: memref<8x128xf32, #tpu.memory_space<vmem>>) attributes {dimension_semantics = [#tpu.dimension_semantics<parallel>, #tpu.dimension_semantics<arbitrary>], iteration_bounds = array<i64: 2, 1>, scalar_prefetch = 0 : i64, scratch_operands = 1 : i64, tpu.core_type = #tpu.core_type<tc>, window_params = [{transform_indices = @transform_0, window_bounds = array<i64: 1, 64, 160>}, {pipeline_mode = #tpu.pipeline_mode<synchronous>, transform_indices = @transform_1, window_bounds = array<i64: 160, 128>}, {pipeline_mode = #tpu.pipeline_mode<synchronous>, transform_indices = @transform_2, window_bounds = array<i64: 1, 128>}, {pipeline_mode = #tpu.pipeline_mode<synchronous>, transform_indices = @transform_3, window_bounds = array<i64: 128, 128>}, {pipeline_mode = #tpu.pipeline_mode<synchronous>, transform_indices = @transform_4, window_bounds = array<i64: 1, 128>}, {transform_indices = @transform_5, window_bounds = array<i64: 1, 1, 128>}]} {
    %c0_i32 = arith.constant 0 : i32
    %0 = arith.cmpi eq, %arg1, %c0_i32 : i32
    %1 = arith.extui %0 : i1 to i32
    %c0_i32_0 = arith.constant 0 : i32
    %2 = arith.cmpi ne, %1, %c0_i32_0 : i32
    scf.if %2 {
      %cst_15 = arith.constant 0.000000e+00 : f32
      %20 = vector.broadcast %cst_15 : f32 to vector<8x128xf32>
      %c0_16 = arith.constant 0 : index
      %c0_17 = arith.constant 0 : index
      %21 = vector.load %arg8[%c0_16, %c0_17] : memref<8x128xf32, #tpu.memory_space<vmem>>, vector<8x128xf32>
      tpu.vector_store %arg8[%c0_16, %c0_17], %20 {strides = array<i32>} : memref<8x128xf32, #tpu.memory_space<vmem>>, vector<8x128xf32>,
    } else {
    }
    %c0 = arith.constant 0 : index
    %c0_1 = arith.constant 0 : index
    %c0_2 = arith.constant 0 : index
    %3 = vector.load %arg2[%c0, %c0_1, %c0_2] : memref<1x64x160xbf16, #tpu.memory_space<vmem>>, vector<1x64x160xbf16>
    %4 = vector.shape_cast %3 : vector<1x64x160xbf16> to vector<64x160xbf16>
    %c0_3 = arith.constant 0 : index
    %c0_4 = arith.constant 0 : index
    %5 = vector.load %arg3[%c0_3, %c0_4] : memref<160x128xbf16, #tpu.memory_space<vmem>>, vector<160x128xbf16>
    %cst = arith.constant dense<0.000000e+00> : vector<64x128xf32>
    %6 = tpu.matmul %4, %5, %cst {dimension_numbers = #tpu.dot_dimension_numbers<[1], [0], [0], [1], [0, 0, 1, 1], [], []>} : vector<64x160xbf16>, vector<160x128xbf16>, vector<64x128xf32> -> vector<64x128xf32>
    %c0_5 = arith.constant 0 : index
    %c0_6 = arith.constant 0 : index
    %7 = vector.load %arg4[%c0_5, %c0_6] : memref<1x128xf32, #tpu.memory_space<vmem>>, vector<1x128xf32>
    %8 = vector.broadcast %7 : vector<1x128xf32> to vector<64x128xf32>
    %9 = arith.addf %6, %8 : vector<64x128xf32>
    %cst_7 = arith.constant 0.000000e+00 : f32
    %10 = vector.broadcast %cst_7 : f32 to vector<64x128xf32>
    %11 = arith.maximumf %9, %10 : vector<64x128xf32>
    %c0_8 = arith.constant 0 : index
    %c0_9 = arith.constant 0 : index
    %12 = vector.load %arg8[%c0_8, %c0_9] : memref<8x128xf32, #tpu.memory_space<vmem>>, vector<8x128xf32>
    %13 = vector.shape_cast %11 : vector<64x128xf32> to vector<8x8x128xf32>
    %cst_10 = arith.constant dense<0.000000e+00> : vector<8x128xf32>
    %14 = vector.multi_reduction <add>, %13, %cst_10 [0] : vector<8x8x128xf32> to vector<8x128xf32>
    %15 = arith.addf %12, %14 : vector<8x128xf32>
    %c0_11 = arith.constant 0 : index
    %c0_12 = arith.constant 0 : index
    %16 = vector.load %arg8[%c0_11, %c0_12] : memref<8x128xf32, #tpu.memory_space<vmem>>, vector<8x128xf32>
    tpu.vector_store %arg8[%c0_11, %c0_12], %15 {strides = array<i32>} : memref<8x128xf32, #tpu.memory_space<vmem>>, vector<8x128xf32>,
    %c0_i32_13 = arith.constant 0 : i32
    %17 = arith.cmpi eq, %arg1, %c0_i32_13 : i32
    %18 = arith.extui %17 : i1 to i32
    %c0_i32_14 = arith.constant 0 : i32
    %19 = arith.cmpi ne, %18, %c0_i32_14 : i32
    scf.if %19 {
      %c0_15 = arith.constant 0 : index
      %c0_16 = arith.constant 0 : index
      %20 = vector.load %arg8[%c0_15, %c0_16] : memref<8x128xf32, #tpu.memory_space<vmem>>, vector<8x128xf32>
      %cst_17 = arith.constant dense<0.000000e+00> : vector<128xf32>
      %21 = vector.multi_reduction <add>, %20, %cst_17 [0] : vector<8x128xf32> to vector<128xf32>
      %22 = vector.shape_cast %21 : vector<128xf32> to vector<1x128xf32>
      %cst_18 = arith.constant 1.562500e-02 : f32
      %23 = vector.broadcast %cst_18 : f32 to vector<1x128xf32>
      %24 = arith.mulf %22, %23 : vector<1x128xf32>
      %c0_19 = arith.constant 0 : index
      %c0_20 = arith.constant 0 : index
      %25 = vector.load %arg5[%c0_19, %c0_20] : memref<128x128xf32, #tpu.memory_space<vmem>>, vector<128x128xf32>
      %cst_21 = arith.constant dense<0.000000e+00> : vector<1x128xf32>
      %26 = tpu.matmul %24, %25, %cst_21 {dimension_numbers = #tpu.dot_dimension_numbers<[1], [0], [0], [1], [0, 0, 1, 1], [], []>} : vector<1x128xf32>, vector<128x128xf32>, vector<1x128xf32> -> vector<1x128xf32>
      %c0_22 = arith.constant 0 : index
      %c0_23 = arith.constant 0 : index
      %27 = vector.load %arg6[%c0_22, %c0_23] : memref<1x128xf32, #tpu.memory_space<vmem>>, vector<1x128xf32>
      %28 = arith.addf %26, %27 : vector<1x128xf32>
      %c0_24 = arith.constant 0 : index
      %c0_25 = arith.constant 0 : index
      %c0_26 = arith.constant 0 : index
      %29 = vector.load %arg7[%c0_24, %c0_25, %c0_26] : memref<1x1x128xf32, #tpu.memory_space<vmem>>, vector<1x1x128xf32>
      %30 = vector.shape_cast %29 : vector<1x1x128xf32> to vector<1x128xf32>
      %31 = vector.shape_cast %28 : vector<1x128xf32> to vector<1x1x128xf32>
      tpu.vector_store %arg7[%c0_24, %c0_25, %c0_26], %31 {strides = array<i32>} : memref<1x1x128xf32, #tpu.memory_space<vmem>>, vector<1x1x128xf32>,
    } else {
    }
    return
  }
  func.func @transform_0(%arg0: i32, %arg1: i32) -> (i32, i32, i32) {
    %c0_i32 = arith.constant 0 : i32
    %c0_i32_0 = arith.constant 0 : i32
    return %arg0, %arg1, %c0_i32 : i32, i32, i32
  }
  func.func @transform_1(%arg0: i32, %arg1: i32) -> (i32, i32) {
    %c0_i32 = arith.constant 0 : i32
    %c0_i32_0 = arith.constant 0 : i32
    %c0_i32_1 = arith.constant 0 : i32
    return %c0_i32, %c0_i32_0 : i32, i32
  }
  func.func @transform_2(%arg0: i32, %arg1: i32) -> (i32, i32) {
    %c0_i32 = arith.constant 0 : i32
    %c0_i32_0 = arith.constant 0 : i32
    %c0_i32_1 = arith.constant 0 : i32
    return %c0_i32, %c0_i32_0 : i32, i32
  }
  func.func @transform_3(%arg0: i32, %arg1: i32) -> (i32, i32) {
    %c0_i32 = arith.constant 0 : i32
    %c0_i32_0 = arith.constant 0 : i32
    %c0_i32_1 = arith.constant 0 : i32
    return %c0_i32, %c0_i32_0 : i32, i32
  }
  func.func @transform_4(%arg0: i32, %arg1: i32) -> (i32, i32) {
    %c0_i32 = arith.constant 0 : i32
    %c0_i32_0 = arith.constant 0 : i32
    %c0_i32_1 = arith.constant 0 : i32
    return %c0_i32, %c0_i32_0 : i32, i32
  }
  func.func @transform_5(%arg0: i32, %arg1: i32) -> (i32, i32, i32) {
    %c0_i32 = arith.constant 0 : i32
    %c0_i32_0 = arith.constant 0 : i32
    %c0_i32_1 = arith.constant 0 : i32
    return %arg0, %c0_i32, %c0_i32_0 : i32, i32, i32
  }
}

</mosaic_0001>

<llo_original>
// kernel: tpu_custom_call.1
$region0: #{tpu_custom_call.1}
  #allocation0 [shape = 'u32[]', space=smem, size = 0x4, offset = 0x4, fixed_abs, tag = 'smem constant byte address 0x4 - core index']
  #allocation1 [shape = 'u32[72,128]{1,0:T(1,128)}', space=vmem, size = 0x9000, scoped, tag = 'internal scratch']
  #allocation2 [shape = 'f32[8,128]{1,0:T(8,128)}', space=vmem, size = 0x1000, scoped, tag = 'scratch operand']
  %s0 = inlined_call_operand.hbm [shape: bf16[2,64,160], index: 0, kind: input, shape index: {}]
  %s1 = inlined_call_operand.hbm [shape: bf16[160,128], index: 1, kind: input, shape index: {}]
  %s2 = inlined_call_operand.vmem [shape: f32[1,128], index: 2, kind: input, shape index: {}]
  %s3 = inlined_call_operand.hbm [shape: f32[128,128], index: 3, kind: input, shape index: {}]
  %s4 = inlined_call_operand.vmem [shape: f32[1,128], index: 4, kind: input, shape index: {}]
  %s5 = inlined_call_operand.hbm [shape: f32[2,1,128], index: 5, kind: output, shape index: {}]
  %s6 = sld [smem:[#allocation0]]
  $region73: #{tpu_custom_call.1} parent=0
    _
  %s8 = ssub.s32 1, %s6
  %s9 = scalar_select 0, %s8, %s6
  $region1: #{tpu_custom_call.1} parent=0
    #allocation3 [shape = 'u8[65536]{0}', space=vmem, size = 0x10000, scoped, tag = 'input window, operand 0']
    #allocation4 [shape = 's32[2]{0}', space=sflag, size = 0x8, scoped, tag = 'scoped memory for tpu_custom_call.1']
    #allocation5 [shape = 's32[2]{0}', space=sflag, size = 0x8, scoped, tag = 'scoped memory for tpu_custom_call.1']
    #allocation6 [shape = 'u8[40960]{0}', space=vmem, size = 0xa000, scoped, tag = 'input window, operand 1, single buffered']
    #allocation7 [shape = 's32[1]{0}', space=sflag, size = 0x4, scoped, tag = 'scoped memory for tpu_custom_call.1']
    #allocation8 [shape = 'u8[65536]{0}', space=vmem, size = 0x10000, scoped, tag = 'input window, operand 3, single buffered']
    #allocation9 [shape = 'u8[1024]{0}', space=vmem, size = 0x400, scoped, tag = 'output window, operand 0']
    %10 = vsyncpa [#allocation4], 0
    %s11 = scalar_lea.sflag [#allocation4], 1
    %12 = vsyncpa %s11, 0
    %13 = vsyncpa [#allocation7], 0
    %14 = vsyncpa [#allocation5], 0
    %s15 = scalar_lea.sflag [#allocation5], 1
    %16 = vsyncpa %s15, 0
    loop: start=0, step=1, limit=4
    $region2: #{tpu_custom_call.1} parent=1 // loop_pre_header
      _
    $region3: #{tpu_custom_call.1} parent=1 // loop_header
      %s18 = sphi 0, %s22
      %p19 = scmp.ge.s32.totalorder %s18, 4
      %s25 = sphi 0, %s37
      %s26 = sphi 0, %s33
      %s27 = sphi 0, %s25
      %s28 = sphi 0, %s26
      %s29 = sphi 0, %s27
      %s30 = sphi 0, %s28
      %s42 = sphi 0, %s44
      %s45 = sphi 0, %s42
      %s46 = sphi 0, %s45
      %s62 = sphi 0, %s46
      %s66 = sphi 0, %s66
      %s68 = sphi 0, %s66
      %s69 = sphi 0, %s68
      %s83 = sphi 0, %s69
      %s87 = sphi 0, %s87
      %s89 = sphi 0, %s87
      %s90 = sphi 0, %s89
      %s104 = sphi 0, %s90
      %s108 = sphi 0, %s108
      %s110 = sphi 0, %s108
      %s111 = sphi 0, %s110
      %s125 = sphi 0, %s111
      %s129 = sphi 0, %s129
      %s131 = sphi 0, %s129
      %s132 = sphi 0, %s131
      %s146 = sphi 0, %s132
      %s152 = sphi 0, %s154
      %s155 = sphi 0, %s152
      %s156 = sphi 0, %s155
      %s172 = sphi 0, %s156
    $region4: #{tpu_custom_call.1} parent=1 // loop_header_branch
      %21 = sbr.rel (%p19) target = $region8
    $region5: #{tpu_custom_call.1} parent=1 // loop_body
      %s23 = ssub.s32 %s18, 1
      %s24 = ssub.s32 %s18, 2
      %s31 = sadd.s32 1, %s26
      %p32 = scmp.ge.s32.totalorder %s31, 1
      %s33 = scalar_select %p32, 0, %s31
      %s34 = sadd.s32 1, %s25
      %s35 = scalar_select %p32, %s34, %s25
      %p36 = scmp.ge.s32.totalorder %s35, 2
      %s37 = scalar_select %p36, 0, %s35
      %s38 = ssub.s32 %s25, %s37
      %s39 = ssub.s32 %s26, %s33
      %s40 = sor.u32 %s38, %s39
      %p41 = scmp.eq.s32.totalorder %s40, 0
      %s43 = sadd.s32 %s42, 1
      %s44 = scalar_select %p41, %s42, %s43
      %p47 = pneg %p41
      %p48 = scmp.eq.s32.totalorder %s18, 1
      %p49 = por %p47, %p48
      %p50 = scmp.ne.s32.totalorder %s42, %s45
      %p51 = scmp.eq.s32.totalorder %s18, 0
      %p52 = por %p50, %p51
      %p53 = scmp.ne.s32.totalorder %s42, %s45
      %p54 = scmp.eq.s32.totalorder %s23, 1
      %p55 = por %p53, %p54
      %p56 = scmp.ne.s32.totalorder %s45, %s46
      %p57 = scmp.eq.s32.totalorder %s23, 0
      %p58 = por %p56, %p57
      %p59 = scmp.ne.s32.totalorder %s45, %s46
      %p60 = scmp.eq.s32.totalorder %s24, 1
      %p61 = por %p59, %p60
      %p63 = scmp.ne.s32.totalorder %s46, %s62
      %p64 = scmp.eq.s32.totalorder %s24, 0
      %p65 = por %p63, %p64
      %s67 = sadd.s32 %s66, 1
      %p70 = scmp.eq.s32.totalorder %s18, 1
      %p71 = scmp.ne.s32.totalorder %s66, %s68
      %p72 = scmp.eq.s32.totalorder %s18, 0
      %p73 = por %p71, %p72
      %p74 = scmp.ne.s32.totalorder %s66, %s68
      %p75 = scmp.eq.s32.totalorder %s23, 1
      %p76 = por %p74, %p75
      %p77 = scmp.ne.s32.totalorder %s68, %s69
      %p78 = scmp.eq.s32.totalorder %s23, 0
      %p79 = por %p77, %p78
      %p80 = scmp.ne.s32.totalorder %s68, %s69
      %p81 = scmp.eq.s32.totalorder %s24, 1
      %p82 = por %p80, %p81
      %p84 = scmp.ne.s32.totalorder %s69, %s83
      %p85 = scmp.eq.s32.totalorder %s24, 0
      %p86 = por %p84, %p85
      %s88 = sadd.s32 %s87, 1
      %p91 = scmp.eq.s32.totalorder %s18, 1
      %p92 = scmp.ne.s32.totalorder %s87, %s89
      %p93 = scmp.eq.s32.totalorder %s18, 0
      %p94 = por %p92, %p93
      %p95 = scmp.ne.s32.totalorder %s87, %s89
      %p96 = scmp.eq.s32.totalorder %s23, 1
      %p97 = por %p95, %p96
      %p98 = scmp.ne.s32.totalorder %s89, %s90
      %p99 = scmp.eq.s32.totalorder %s23, 0
      %p100 = por %p98, %p99
      %p101 = scmp.ne.s32.totalorder %s89, %s90
      %p102 = scmp.eq.s32.totalorder %s24, 1
      %p103 = por %p101, %p102
      %p105 = scmp.ne.s32.totalorder %s90, %s104
      %p106 = scmp.eq.s32.totalorder %s24, 0
      %p107 = por %p105, %p106
      %s109 = sadd.s32 %s108, 1
      %p112 = scmp.eq.s32.totalorder %s18, 1
      %p113 = scmp.ne.s32.totalorder %s108, %s110
      %p114 = scmp.eq.s32.totalorder %s18, 0
      %p115 = por %p113, %p114
      %p116 = scmp.ne.s32.totalorder %s108, %s110
      %p117 = scmp.eq.s32.totalorder %s23, 1
      %p118 = por %p116, %p117
      %p119 = scmp.ne.s32.totalorder %s110, %s111
      %p120 = scmp.eq.s32.totalorder %s23, 0
      %p121 = por %p119, %p120
      %p122 = scmp.ne.s32.totalorder %s110, %s111
      %p123 = scmp.eq.s32.totalorder %s24, 1
      %p124 = por %p122, %p123
      %p126 = scmp.ne.s32.totalorder %s111, %s125
      %p127 = scmp.eq.s32.totalorder %s24, 0
      %p128 = por %p126, %p127
      %s130 = sadd.s32 %s129, 1
      %p133 = scmp.eq.s32.totalorder %s18, 1
      %p134 = scmp.ne.s32.totalorder %s129, %s131
      %p135 = scmp.eq.s32.totalorder %s18, 0
      %p136 = por %p134, %p135
      %p137 = scmp.ne.s32.totalorder %s129, %s131
      %p138 = scmp.eq.s32.totalorder %s23, 1
      %p139 = por %p137, %p138
      %p140 = scmp.ne.s32.totalorder %s131, %s132
      %p141 = scmp.eq.s32.totalorder %s23, 0
      %p142 = por %p140, %p141
      %p143 = scmp.ne.s32.totalorder %s131, %s132
      %p144 = scmp.eq.s32.totalorder %s24, 1
      %p145 = por %p143, %p144
      %p147 = scmp.ne.s32.totalorder %s132, %s146
      %p148 = scmp.eq.s32.totalorder %s24, 0
      %p149 = por %p147, %p148
      %s150 = ssub.s32 %s25, %s37
      %p151 = scmp.eq.s32.totalorder %s150, 0
      %s153 = sadd.s32 %s152, 1
      %s154 = scalar_select %p151, %s152, %s153
      %p157 = pneg %p151
      %p158 = scmp.eq.s32.totalorder %s18, 1
      %p159 = por %p157, %p158
      %p160 = scmp.ne.s32.totalorder %s152, %s155
      %p161 = scmp.eq.s32.totalorder %s18, 0
      %p162 = por %p160, %p161
      %p163 = scmp.ne.s32.totalorder %s152, %s155
      %p164 = scmp.eq.s32.totalorder %s23, 1
      %p165 = por %p163, %p164
      %p166 = scmp.ne.s32.totalorder %s155, %s156
      %p167 = scmp.eq.s32.totalorder %s23, 0
      %p168 = por %p166, %p167
      %p169 = scmp.ne.s32.totalorder %s155, %s156
      %p170 = scmp.eq.s32.totalorder %s24, 1
      %p171 = por %p169, %p170
      %p173 = scmp.ne.s32.totalorder %s156, %s172
      %p174 = scmp.eq.s32.totalorder %s24, 0
      %p175 = por %p173, %p174
      %p176 = scmp.le.s32.totalorder 1, %s18
      %p177 = scmp.lt.s32.totalorder %s18, 3
      %p178 = pnand %p176, %p177
      %p179 = pneg %p178
      // Predicated region
      $region9: #{tpu_custom_call.1} parent=5 // pred_check
        _
      $region10: #{tpu_custom_call.1} parent=5 // pred_check_branch
        %181 = sbr.rel (%p178) target = $region12
      $region11: #{tpu_custom_call.1} parent=5 // pred_region
        %s182 = ssub.s32 %s18, 1
        // Predicated region
        $region13: #{tpu_custom_call.1} parent=11 // pred_check
          %p183 = pneg %p79
        $region14: #{tpu_custom_call.1} parent=11 // pred_check_branch
          %185 = sbr.rel (%p183) target = $region16
        $region15: #{tpu_custom_call.1} parent=11 // pred_region
          %187 = vsyncadd [#allocation7], 0
          %s188 = sshll.u32 %s1, 4
          %s189 = int_to_ptr.hbm [resolvable:$true] %s188
          %s190 = sshll.u32 [#allocation6], 4
          %s191 = int_to_ptr.vmem [resolvable:$true] %s190
          %196 = dma.hbm_to_vmem [thread:$0]  %s189, 1280, %s191, [#allocation7], 64, 64, 4
        $region16: #{tpu_custom_call.1} parent=11 // pred_fallthru
          _
        // Predicated region
        $region17: #{tpu_custom_call.1} parent=11 // pred_check
          %p197 = pneg %p100
        $region18: #{tpu_custom_call.1} parent=11 // pred_check_branch
          %199 = sbr.rel (%p197) target = $region20
        $region19: #{tpu_custom_call.1} parent=11 // pred_region
          _
        $region20: #{tpu_custom_call.1} parent=11 // pred_fallthru
          _
        // Predicated region
        $region21: #{tpu_custom_call.1} parent=11 // pred_check
          %p200 = pneg %p121
        $region22: #{tpu_custom_call.1} parent=11 // pred_check_branch
          %202 = sbr.rel (%p200) target = $region24
        $region23: #{tpu_custom_call.1} parent=11 // pred_region
          %204 = vsyncadd [#allocation7], 0
          %s205 = sshll.u32 %s3, 4
          %s206 = int_to_ptr.hbm [resolvable:$true] %s205
          %s207 = sshll.u32 [#allocation8], 4
          %s208 = int_to_ptr.vmem [resolvable:$true] %s207
          %213 = dma.hbm_to_vmem [thread:$0]  %s206, 2048, %s208, [#allocation7], 128, 128, 8
        $region24: #{tpu_custom_call.1} parent=11 // pred_fallthru
          _
        // Predicated region
        $region25: #{tpu_custom_call.1} parent=11 // pred_check
          %p214 = pneg %p142
        $region26: #{tpu_custom_call.1} parent=11 // pred_check_branch
          %216 = sbr.rel (%p214) target = $region28
        $region27: #{tpu_custom_call.1} parent=11 // pred_region
          _
        $region28: #{tpu_custom_call.1} parent=11 // pred_fallthru
          _
      $region12: #{tpu_custom_call.1} parent=5 // pred_fallthru
        _
      %p217 = scmp.lt.s32.totalorder %s18, 2
      // Predicated region
      $region29: #{tpu_custom_call.1} parent=5 // pred_check
        %p218 = pneg %p217
      $region30: #{tpu_custom_call.1} parent=5 // pred_check_branch
        %220 = sbr.rel (%p218) target = $region32
      $region31: #{tpu_custom_call.1} parent=5 // pred_region
        // Predicated region
        $region33: #{tpu_custom_call.1} parent=31 // pred_check
          %p221 = pneg %p52
        $region34: #{tpu_custom_call.1} parent=31 // pred_check_branch
          %223 = sbr.rel (%p221) target = $region36
        $region35: #{tpu_custom_call.1} parent=31 // pred_region
          %s224 = sand.u32 %s42, 1
          %s225 = scalar_lea.sflag [#allocation4], %s224
          %s226 = sand.u32 %s42, 1
          %s227 = smul.addr %s226, 64
          %s228 = scalar_lea.vmem [#allocation3], %s227
          %s229 = smul.u32 8, %s26
          %231 = vsyncadd %s225, 0
          %s232 = smul.addr %s229, 2
          %s233 = smul.addr %s25, 16
          %s234 = sadd.s32 %s232, %s233
          %s235 = smul.addr %s234, 4
          %s236 = scalar_lea.hbm %s0, %s235
          %s237 = sshll.u32 %s236, 4
          %s238 = int_to_ptr.hbm [resolvable:$true] %s237
          %s239 = sshll.u32 %s228, 4
          %s240 = int_to_ptr.vmem [resolvable:$true] %s239
          %245 = dma.hbm_to_vmem [thread:$0]  %s238, 1024, %s240, %s225, 128, 128, 8
        $region36: #{tpu_custom_call.1} parent=31 // pred_fallthru
          _
      $region32: #{tpu_custom_call.1} parent=5 // pred_fallthru
        _
      %p246 = scmp.le.s32.totalorder 1, %s18
      %p247 = scmp.lt.s32.totalorder %s18, 3
      %p248 = pnand %p246, %p247
      %p249 = pneg %p248
      // Predicated region
      $region37: #{tpu_custom_call.1} parent=5 // pred_check
        _
      $region38: #{tpu_custom_call.1} parent=5 // pred_check_branch
        %251 = sbr.rel (%p248) target = $region40
      $region39: #{tpu_custom_call.1} parent=5 // pred_region
        %s252 = ssub.s32 %s18, 1
        %s253 = sand.u32 %s45, 1
        %s254 = scalar_lea.sflag [#allocation4], %s253
        %s255 = sand.u32 %s45, 1
        %s256 = smul.addr %s255, 64
        %s257 = scalar_lea.vmem [#allocation3], %s256
        // Predicated region
        $region41: #{tpu_custom_call.1} parent=39 // pred_check
          %p258 = pneg %p58
        $region42: #{tpu_custom_call.1} parent=39 // pred_check_branch
          %260 = sbr.rel (%p258) target = $region44
        $region43: #{tpu_custom_call.1} parent=39 // pred_region
          %262 = dma.done %s254, 1024
        $region44: #{tpu_custom_call.1} parent=39 // pred_fallthru
          _
        // Predicated region
        $region45: #{tpu_custom_call.1} parent=39 // pred_check
          %p263 = pneg %p79
        $region46: #{tpu_custom_call.1} parent=39 // pred_check_branch
          %265 = sbr.rel (%p263) target = $region48
        $region47: #{tpu_custom_call.1} parent=39 // pred_region
          %267 = dma.done [#allocation7], 1280
        $region48: #{tpu_custom_call.1} parent=39 // pred_fallthru
          _
        // Predicated region
        $region49: #{tpu_custom_call.1} parent=39 // pred_check
          %p268 = pneg %p121
        $region50: #{tpu_custom_call.1} parent=39 // pred_check_branch
          %270 = sbr.rel (%p268) target = $region52
        $region51: #{tpu_custom_call.1} parent=39 // pred_region
          %272 = dma.done [#allocation7], 2048
        $region52: #{tpu_custom_call.1} parent=39 // pred_fallthru
          _
        %s273 = sand.u32 %s45, 1
        %s274 = scalar_lea.sflag [#allocation4], %s273
        %s275 = sand.u32 %s45, 1
        %s276 = smul.addr %s275, 64
        %s277 = scalar_lea.vmem [#allocation3], %s276
        %p278 = pneg %p58
        %p279 = pneg %p55
        %p280 = pneg %p79
        %p281 = pneg %p76
        %p282 = pneg %p100
        %p283 = pneg %p97
        %p284 = pneg %p121
        %p285 = pneg %p118
        %p286 = pneg %p142
        %p287 = pneg %p139
        %p288 = pneg %p168
        %p289 = pneg %p165
        %s290 = sand.u32 %s155, 1
        %s291 = scalar_lea.sflag [#allocation5], %s290
        %s292 = sand.u32 %s155, 1
        %s293 = scalar_lea.vmem [#allocation9], %s292
        %s294 = smul.u32 8, %s28
        %p296 = scmp.eq.s32.totalorder %s28, 0
        // Predicated region
        $region53: #{tpu_custom_call.1} parent=39 // pred_check
          %p297 = pneg %p296
        $region54: #{tpu_custom_call.1} parent=39 // pred_check_branch
          %299 = sbr.rel (%p297) target = $region56
        $region55: #{tpu_custom_call.1} parent=39 // pred_region
          %300 = vst [vmem:[#allocation2] sm:$0xff] 0.0
        $region56: #{tpu_custom_call.1} parent=39 // pred_fallthru
          _
        %v301 = vld [vmem:[%s257] sm:$0xff]
        %v302 = vld [vmem:[%s257 + $0x8] sm:$0xff]
        %v303 = vld [vmem:[%s257 + $0x10] sm:$0xff]
        %v304 = vld [vmem:[%s257 + $0x18] sm:$0xff]
        %v305 = vld [vmem:[%s257 + $0x20] sm:$0xff]
        %v306 = vld [vmem:[%s257 + $0x28] sm:$0xff]
        %v307 = vld [vmem:[%s257 + $0x30] sm:$0xff]
        %v308 = vld [vmem:[%s257 + $0x38] sm:$0xff]
        %v309 = vld [vmem:[#allocation6] sm:$0xf]
        %v310 = vld [vmem:[#allocation6 + $0x4] sm:$0xf]
        %v311 = vld [vmem:[#allocation6 + $0x8] sm:$0xf]
        %v312 = vld [vmem:[#allocation6 + $0xc] sm:$0xf]
        %v313 = vld [vmem:[#allocation6 + $0x10] sm:$0xf]
        %v314 = vld [vmem:[#allocation6 + $0x14] sm:$0xf]
        %v315 = vld [vmem:[#allocation6 + $0x18] sm:$0xf]
        %v316 = vld [vmem:[#allocation6 + $0x1c] sm:$0xf]
        %v317 = vld [vmem:[#allocation6 + $0x20] sm:$0xf]
        %v318 = vld [vmem:[#allocation6 + $0x24] sm:$0xf]
        %v319 = vld [vmem:[#allocation6 + $0x28] sm:$0xf]
        %v320 = vld [vmem:[#allocation6 + $0x2c] sm:$0xf]
        %v321 = vld [vmem:[#allocation6 + $0x30] sm:$0xf]
        %v322 = vld [vmem:[#allocation6 + $0x34] sm:$0xf]
        %v323 = vld [vmem:[#allocation6 + $0x38] sm:$0xf]
        %v324 = vld [vmem:[#allocation6 + $0x3c] sm:$0xf]
        %v325 = vld [vmem:[#allocation6 + $0x40] sm:$0xf]
        %v326 = vld [vmem:[#allocation6 + $0x44] sm:$0xf]
        %v327 = vld [vmem:[#allocation6 + $0x48] sm:$0xf]
        %v328 = vld [vmem:[#allocation6 + $0x4c] sm:$0xf]
        %v329 = vld [vmem:[%s2] sm:$0x1]
        %v331 = vperm.slane %v329, 0
        %v341 = vunpack.c.l.b16 %v301
        %v342 = vunpack.c.h.b16 %v301
        %v343 = vunpack.c.l.b16 %v302
        %v344 = vunpack.c.h.b16 %v302
        %v345 = vunpack.c.l.b16 %v303
        %v346 = vunpack.c.h.b16 %v303
        %v347 = vunpack.c.l.b16 %v304
        %v348 = vunpack.c.h.b16 %v304
        %v349 = vunpack.c.l.b16 %v305
        %v350 = vunpack.c.h.b16 %v305
        %v351 = vunpack.c.l.b16 %v306
        %v352 = vunpack.c.h.b16 %v306
        %v353 = vunpack.c.l.b16 %v307
        %v354 = vunpack.c.h.b16 %v307
        %v355 = vunpack.c.l.b16 %v308
        %v356 = vunpack.c.h.b16 %v308
        %v357 = vpack.c.b16 %v343, %v341
        %v358 = vpack.c.b16 %v344, %v342
        %v359 = vpack.c.b16 %v347, %v345
        %v360 = vpack.c.b16 %v348, %v346
        %v361 = vpack.c.b16 %v351, %v349
        %v362 = vpack.c.b16 %v352, %v350
        %v363 = vpack.c.b16 %v355, %v353
        %v364 = vpack.c.b16 %v356, %v354
        %v389 = vunpack.c.l.b16 %v309
        %v390 = vunpack.c.l.b16 %v310
        %v391 = vunpack.c.l.b16 %v311
        %v392 = vunpack.c.l.b16 %v312
        %v393 = vunpack.c.l.b16 %v313
        %v394 = vunpack.c.l.b16 %v314
        %v395 = vunpack.c.l.b16 %v315
        %v396 = vunpack.c.l.b16 %v316
        %v397 = vunpack.c.l.b16 %v317
        %v398 = vunpack.c.l.b16 %v318
        %v399 = vunpack.c.l.b16 %v319
        %v400 = vunpack.c.l.b16 %v320
        %v401 = vunpack.c.l.b16 %v321
        %v402 = vunpack.c.l.b16 %v322
        %v403 = vunpack.c.l.b16 %v323
        %v404 = vunpack.c.l.b16 %v324
        %v405 = vunpack.c.l.b16 %v325
        %v406 = vunpack.c.l.b16 %v326
        %v407 = vunpack.c.l.b16 %v327
        %v408 = vunpack.c.l.b16 %v328
        %v409 = vpack.c.b16 %v390, %v389
        %v410 = vpack.c.b16 %v392, %v391
        %v411 = vpack.c.b16 %v394, %v393
        %v412 = vpack.c.b16 %v396, %v395
        %v413 = vpack.c.b16 %v398, %v397
        %v414 = vpack.c.b16 %v400, %v399
        %v415 = vpack.c.b16 %v402, %v401
        %v416 = vpack.c.b16 %v404, %v403
        %v417 = vpack.c.b16 %v406, %v405
        %v418 = vpack.c.b16 %v408, %v407
        %vm429 = vcmask 261120
        %v431 = vsel %vm429, %v358, 0
        %v434 = vsel %vm429, %v360, 0
        %v437 = vsel %vm429, %v362, 0
        %v440 = vsel %vm429, %v364, 0
        %442 = vmatpush.bf16.msra.mxu0 %v416
        %443 = vmatpush.bf16.msra.mxu0 %v415
        %444 = vmatpush.bf16.msra.mxu0 %v414
        %445 = vmatpush.bf16.msra.mxu0 %v413
        %446 = vmatpush.bf16.msra.mxu0 %v412
        %447 = vmatpush.bf16.msra.mxu0 %v411
        %448 = vmatpush.bf16.msra.mxu0 %v410
        %449 = vmatpush.bf16.msra.mxu0 %v409
        %450 = vmatmul.bf16.gmra.mxu0 %v357
        %v451 = vpop.f32.mrf.mxu0
        %v452 = vadd.f32 %v331, %v451
        %v453 = vpop.f32.mrf.mxu0
        %v454 = vadd.f32 %v331, %v453
        %455 = vmatmul.bf16.gmra.mxu0 %v359
        %v456 = vpop.f32.mrf.mxu0
        %v457 = vadd.f32 %v331, %v456
        %v458 = vpop.f32.mrf.mxu0
        %v459 = vadd.f32 %v331, %v458
        %460 = vmatmul.bf16.gmra.mxu0 %v361
        %v461 = vpop.f32.mrf.mxu0
        %v462 = vadd.f32 %v331, %v461
        %v463 = vpop.f32.mrf.mxu0
        %v464 = vadd.f32 %v331, %v463
        %465 = vmatmul.bf16.gmra.mxu0 %v363
        %v466 = vpop.f32.mrf.mxu0
        %v467 = vadd.f32 %v331, %v466
        %v468 = vpop.f32.mrf.mxu0
        %v469 = vadd.f32 %v331, %v468
        %470 = vdwg.mxu0
        %471 = vmatpush.bf16.msra.mxu0 0
        %472 = vmatpush.bf16.msra.mxu0 0
        %473 = vmatpush.bf16.msra.mxu0 0
        %474 = vmatpush.bf16.msra.mxu0 0
        %475 = vmatpush.bf16.msra.mxu0 0
        %476 = vmatpush.bf16.msra.mxu0 0
        %477 = vmatpush.bf16.msra.mxu0 %v418
        %478 = vmatpush.bf16.msra.mxu0 %v417
        %479 = vmatmul.bf16.gmra.mxu0 %v431
        %v480 = vpop.f32.mrf.mxu0
        %v481 = vadd.f32 %v452, %v480
        %v482 = vpop.f32.mrf.mxu0
        %v483 = vadd.f32 %v454, %v482
        %484 = vmatmul.bf16.gmra.mxu0 %v434
        %v485 = vpop.f32.mrf.mxu0
        %v486 = vadd.f32 %v457, %v485
        %v487 = vpop.f32.mrf.mxu0
        %v488 = vadd.f32 %v459, %v487
        %489 = vmatmul.bf16.gmra.mxu0 %v437
        %v490 = vpop.f32.mrf.mxu0
        %v491 = vadd.f32 %v462, %v490
        %v492 = vpop.f32.mrf.mxu0
        %v493 = vadd.f32 %v464, %v492
        %494 = vmatmul.bf16.gmra.mxu0 %v440
        %v495 = vpop.f32.mrf.mxu0
        %v496 = vadd.f32 %v467, %v495
        %v497 = vpop.f32.mrf.mxu0
        %v498 = vadd.f32 %v469, %v497
        %499 = vdwg.mxu0
        %v500 = vmax.f32 %v481, 0.0
        %v501 = vmax.f32 %v483, 0.0
        %v502 = vmax.f32 %v486, 0.0
        %v503 = vmax.f32 %v488, 0.0
        %v504 = vmax.f32 %v491, 0.0
        %v505 = vmax.f32 %v493, 0.0
        %v506 = vmax.f32 %v496, 0.0
        %v507 = vmax.f32 %v498, 0.0
        %v508 = vld [vmem:[#allocation2] sm:$0xff]
        %v509 = vadd.f32 %v500, %v501
        %v510 = vadd.f32 %v509, %v502
        %v511 = vadd.f32 %v510, %v503
        %v512 = vadd.f32 %v511, %v504
        %v513 = vadd.f32 %v512, %v505
        %v514 = vadd.f32 %v513, %v506
        %v515 = vadd.f32 %v514, %v507
        %v516 = vadd.f32 %v508, %v515
        %517 = vst [vmem:[#allocation2] sm:$0xff] %v516
        // Predicated region
        $region57: #{tpu_custom_call.1} parent=39 // pred_check
          %p518 = pneg %p296
        $region58: #{tpu_custom_call.1} parent=39 // pred_check_branch
          %520 = sbr.rel (%p518) target = $region60
        $region59: #{tpu_custom_call.1} parent=39 // pred_region
          %v521 = vld [vmem:[#allocation2] sm:$0xff]
          %v522 = vrot.slane %v521, 4
          %v523 = vadd.f32 %v521, %v522
          %v524 = vrot.slane %v523, 2
          %v525 = vadd.f32 %v523, %v524
          %v526 = vrot.slane %v525, 1
          %v527 = vadd.f32 %v525, %v526
          %v528 = vmul.f32 %v527, 0.015625
          %v529 = vld [vmem:[#allocation8] sm:$0xff]
          %v530 = vld [vmem:[#allocation8 + $0x8] sm:$0xff]
          %v531 = vld [vmem:[#allocation8 + $0x10] sm:$0xff]
          %v532 = vld [vmem:[#allocation8 + $0x18] sm:$0xff]
          %v533 = vld [vmem:[#allocation8 + $0x20] sm:$0xff]
          %v534 = vld [vmem:[#allocation8 + $0x28] sm:$0xff]
          %v535 = vld [vmem:[#allocation8 + $0x30] sm:$0xff]
          %v536 = vld [vmem:[#allocation8 + $0x38] sm:$0xff]
          %v537 = vld [vmem:[#allocation8 + $0x40] sm:$0xff]
          %v538 = vld [vmem:[#allocation8 + $0x48] sm:$0xff]
          %v539 = vld [vmem:[#allocation8 + $0x50] sm:$0xff]
          %v540 = vld [vmem:[#allocation8 + $0x58] sm:$0xff]
          %v541 = vld [vmem:[#allocation8 + $0x60] sm:$0xff]
          %v542 = vld [vmem:[#allocation8 + $0x68] sm:$0xff]
          %v543 = vld [vmem:[#allocation8 + $0x70] sm:$0xff]
          %v544 = vld [vmem:[#allocation8 + $0x78] sm:$0xff]
          %v545 = vld [vmem:[%s4] sm:$0x1]
          %546 = vmatpush.msra.mxu0 %v544
          %547 = vmatpush.msra.mxu0 %v543
          %548 = vmatpush.msra.mxu0 %v542
          %549 = vmatpush.msra.mxu0 %v541
          %550 = vmatpush.msra.mxu0 %v540
          %551 = vmatpush.msra.mxu0 %v539
          %552 = vmatpush.msra.mxu0 %v538
          %553 = vmatpush.msra.mxu0 %v537
          %554 = vmatpush.msra.mxu0 %v536
          %555 = vmatpush.msra.mxu0 %v535
          %556 = vmatpush.msra.mxu0 %v534
          %557 = vmatpush.msra.mxu0 %v533
          %558 = vmatpush.msra.mxu0 %v532
          %559 = vmatpush.msra.mxu0 %v531
          %560 = vmatpush.msra.mxu0 %v530
          %561 = vmatpush.msra.mxu0 %v529
          %562 = vmatmul.f32.gmra.mxu0 %v528
          %v563 = vpop.f32.mrf.mxu0
          %v564 = vadd.f32 %v545, %v563
          %565 = vdwg.mxu0
          %566 = vst [vmem:[%s293] sm:$0x1] %v564
        $region60: #{tpu_custom_call.1} parent=39 // pred_fallthru
          _
        %s567 = sand.u32 %s155, 1
        %s568 = scalar_lea.sflag [#allocation5], %s567
        %s569 = sand.u32 %s155, 1
        %s570 = scalar_lea.vmem [#allocation9], %s569
        // Predicated region
        $region61: #{tpu_custom_call.1} parent=39 // pred_check
          %p571 = pneg %p165
        $region62: #{tpu_custom_call.1} parent=39 // pred_check_branch
          %573 = sbr.rel (%p571) target = $region64
        $region63: #{tpu_custom_call.1} parent=39 // pred_region
          %575 = vsyncadd %s568, 0
          %s576 = scalar_lea.hbm %s5, %s27
          %s578 = sshll.u32 %s570, 4
          %s579 = int_to_ptr.vmem [resolvable:$true] %s578
          %s580 = sshll.u32 %s576, 4
          %s581 = int_to_ptr.hbm [resolvable:$true] %s580
          %583 = dma.vmem_to_hbm [thread:$0]  %s579, 16, %s581, %s568
        $region64: #{tpu_custom_call.1} parent=39 // pred_fallthru
          _
      $region40: #{tpu_custom_call.1} parent=5 // pred_fallthru
        _
      %p584 = scmp.le.s32.totalorder 2, %s18
      // Predicated region
      $region65: #{tpu_custom_call.1} parent=5 // pred_check
        %p585 = pneg %p584
      $region66: #{tpu_custom_call.1} parent=5 // pred_check_branch
        %587 = sbr.rel (%p585) target = $region68
      $region67: #{tpu_custom_call.1} parent=5 // pred_region
        %s588 = ssub.s32 %s18, 2
        // Predicated region
        $region69: #{tpu_custom_call.1} parent=67 // pred_check
          %p589 = pneg %p171
        $region70: #{tpu_custom_call.1} parent=67 // pred_check_branch
          %591 = sbr.rel (%p589) target = $region72
        $region71: #{tpu_custom_call.1} parent=67 // pred_region
          %s592 = sand.u32 %s156, 1
          %s593 = scalar_lea.sflag [#allocation5], %s592
          %s594 = sand.u32 %s156, 1
          %s595 = scalar_lea.vmem [#allocation9], %s594
          %597 = dma.done %s593, 16
        $region72: #{tpu_custom_call.1} parent=67 // pred_fallthru
          _
      $region68: #{tpu_custom_call.1} parent=5 // pred_fallthru
        _
    $region6: #{tpu_custom_call.1} parent=1 // loop_footer
      %s22 = sadd.s32 1, %s18
    $region7: #{tpu_custom_call.1} parent=1 // loop_footer_branch
      %17 = sbr.rel target = $region3
    $region8: #{tpu_custom_call.1} parent=1 // loop_exit
      _
    %598 = vsyncpa [#allocation4], 1
    %s599 = scalar_lea.sflag [#allocation4], 1
    %600 = vsyncpa %s599, 1
    %601 = vsyncpa [#allocation7], 1
    %602 = vsyncpa [#allocation5], 1
    %s603 = scalar_lea.sflag [#allocation5], 1
    %604 = vsyncpa %s603, 1

</llo_original>
